<compile_context>
chip_gen: v5e
topology: v5e:2x2
jax: 0.10.0
libtpu: 0.0.40
codegen_flags: <defaults>
</compile_context>

<pallas_src>
from functools import partial

import jax
import jax.numpy as jnp
from jax import lax
from jax.experimental import pallas as pl
from jax.experimental.pallas import tpu as pltpu


def _jrc_one_kernel(s0_ref, s1_ref, valid_ref,
                    loss_ref, calib_ref, rank_ref, smax_ref, smin_ref,
                    *, num_positive, alpha, non_sigmoid):
    # s0_ref/s1_ref/valid_ref: [K, Bt] float32 (K on sublanes, B tile on lanes).
    s0 = s0_ref[...]
    s1 = s1_ref[...]
    if not non_sigmoid:
        s0 = jax.nn.sigmoid(s0)
        s1 = jax.nn.sigmoid(s1)
    valid = valid_ref[...]

    K, _ = s0.shape

    # Selection mask along K (sublane axis): first `num_positive` rows pick
    # channel 1.  Kept as a [K, 1] constant and broadcast over lanes.
    k_idx = lax.broadcasted_iota(jnp.int32, (K, 1), 0)
    sel_f = (k_idx < num_positive).astype(jnp.float32)            # [K, 1]

    d01 = s1 - s0                                                  # [K, Bt]
    s_sel = s0 + sel_f * d01                                       # selected channel
    # other - selected == d01 * (1 - 2*sel)
    z = d01 * (1.0 - 2.0 * sel_f)

    # ---- calib loss: -log softmax over the size-2 channel axis --------------
    #   = softplus(s_other - s_sel)   (numerically stable, log1p form)
    loss_calib = jnp.maximum(z, 0.0) + jnp.log1p(jnp.exp(-jnp.abs(z)))

    # ---- rank loss: -log softmax over K (per channel) ------------------------
    #   = logsumexp_K(s_ch) - s_sel   with ch = selected channel
    m0 = jnp.max(s0, axis=0, keepdims=True)                        # [1, Bt]
    m1 = jnp.max(s1, axis=0, keepdims=True)
    lse0 = m0 + jnp.log(jnp.sum(jnp.exp(s0 - m0), axis=0, keepdims=True))
    lse1 = m1 + jnp.log(jnp.sum(jnp.exp(s1 - m1), axis=0, keepdims=True))
    lse_sel = lse0 + sel_f * (lse1 - lse0)                         # [K, Bt] via bcast
    loss_rank = lse_sel - s_sel

    loss_ref[...] = valid * (alpha * loss_calib + (1.0 - alpha) * loss_rank)
    calib_ref[...] = loss_calib
    rank_ref[...] = loss_rank

    # ---- Info: max/min over K of softmax(score, dim=-1)[..., 1] --------------
    # softmax2[..., 1] == sigmoid(s1 - s0); sigmoid is monotone, so reduce the
    # raw difference and apply sigmoid only to the two extrema per column.
    smax_ref[...] = jax.nn.sigmoid(jnp.max(d01, axis=0, keepdims=True))
    smin_ref[...] = jax.nn.sigmoid(jnp.min(d01, axis=0, keepdims=True))


def _pick_b_tile(K, B):
    """Largest lane-tile (multiple of 128) that keeps the double-buffered
    working set under ~16 MiB, with >= 2 grid tiles once B is large enough
    (so ("parallel",) can shard across v7x's 2 TensorCores)."""
    budget = 16 << 20
    # 3 input planes + 3 output planes (K rows each) + 2 single-row outputs,
    # f32, double-buffered.
    bytes_per_lane = (6 * K + 2) * 4 * 2
    max_bt = (budget // bytes_per_lane) // 128 * 128
    max_bt = max(128, min(2048, max_bt))
    if B <= 256:
        # One small tile; block_shape == full array dims (exempt from (8,128)).
        return B
    half = (((B + 1) // 2) + 127) // 128 * 128   # ~B/2 rounded up to 128
    return min(max_bt, half)


def jrc_loss_one(score, valid, num_positive, *, alpha=0.5, non_sigmoid=True,
                 b_tile=None):
    """score: [K, B, 2], valid: [K, B] (PyTorch layout). Returns the loss dict."""
    K, B, two = score.shape
    assert two == 2

    score = score.astype(jnp.float32)
    # Dense per-channel planes in the native [K, B] layout — no transposes.
    s0 = score[..., 0]                              # [K, B]
    s1 = score[..., 1]                              # [K, B]
    valid_f = valid.astype(jnp.float32)             # [K, B]

    if b_tile is None:
        bt = _pick_b_tile(K, B)
    else:
        bt = min(int(b_tile), B)
        if bt < B:
            bt = max(128, (bt // 128) * 128)        # lane tiles must be k*128
            if bt >= B:
                bt = B

    grid = (pl.cdiv(B, bt),)

    bk_spec = pl.BlockSpec((K, bt), lambda i: (0, i))
    b1_spec = pl.BlockSpec((1, bt), lambda i: (0, i))

    out_shape = (
        jax.ShapeDtypeStruct((K, B), jnp.float32),   # Loss_rm/rm
        jax.ShapeDtypeStruct((K, B), jnp.float32),   # Loss_rm/calib
        jax.ShapeDtypeStruct((K, B), jnp.float32),   # Loss_rm/rank
        jax.ShapeDtypeStruct((1, B), jnp.float32),   # Info/score_max
        jax.ShapeDtypeStruct((1, B), jnp.float32),   # Info/score_min
    )

    # Explicit VMEM limit with headroom; stays well under v7x's 64 MiB physical.
    tile_bytes = (6 * K + 2) * 4 * bt * 2            # double-buffered working set
    vmem_limit = int(min(48 << 20, max(32 << 20, 3 * tile_bytes)))

    loss, calib, rank, smax, smin = pl.pallas_call(
        partial(_jrc_one_kernel, num_positive=int(num_positive), alpha=alpha,
                non_sigmoid=non_sigmoid),
        out_shape=out_shape,
        grid=grid,
        in_specs=[bk_spec, bk_spec, bk_spec],
        out_specs=(bk_spec, bk_spec, bk_spec, b1_spec, b1_spec),
        compiler_params=pltpu.CompilerParams(
            dimension_semantics=("parallel",),
            vmem_limit_bytes=vmem_limit),
    )(s0, s1, valid_f)

    return {
        'Loss_rm/rm': loss,
        'Loss_rm/calib': calib,
        'Loss_rm/rank': rank,
        'Info/score_max': smax[0],
        'Info/score_min': smin[0],
    }


def _jrc_one_ref(score, valid, num_positive, *, alpha=0.5, non_sigmoid=True):
    """Pure-JAX reference mirroring the PyTorch forward exactly."""
    K = score.shape[0]
    s = score if non_sigmoid else jax.nn.sigmoid(score)
    sel = (jnp.arange(K) < num_positive).astype(jnp.int32)          # [K]
    sel_idx = jnp.broadcast_to(sel[:, None, None], (*score.shape[:-1], 1))
    vals_calib = jax.nn.softmax(s, axis=-1)
    vals_rank = jax.nn.softmax(s, axis=0)
    loss_calib = -jnp.log(jnp.take_along_axis(vals_calib, sel_idx, axis=-1))[..., 0]
    loss_rank = -jnp.log(jnp.take_along_axis(vals_rank, sel_idx, axis=-1))[..., 0]
    return {
        'Loss_rm/rm': valid * (alpha * loss_calib + (1 - alpha) * loss_rank),
        'Loss_rm/calib': loss_calib,
        'Loss_rm/rank': loss_rank,
        'Info/score_max': jnp.max(vals_calib[..., 1], axis=0),
        'Info/score_min': jnp.min(vals_calib[..., 1], axis=0),
    }


if __name__ == "__main__":
    key = jax.random.PRNGKey(0)
    k1, k2, k3, k4 = jax.random.split(key, 4)

    # Case 1: small problem -> single full-array block (no padding, no grid tiling).
    K, B, P = 16, 12, 4
    score = jax.random.normal(k1, (K, B, 2), dtype=jnp.float32)
    valid = (jax.random.uniform(k2, (K, B)) > 0.2).astype(jnp.float32)

    out = jrc_loss_one(score, valid, P, alpha=0.5, non_sigmoid=True)
    out = jax.tree_util.tree_map(jax.block_until_ready, out)
    ref = _jrc_one_ref(score, valid, P, alpha=0.5, non_sigmoid=True)
    for name in ref:
        assert out[name].shape == ref[name].shape, (name, out[name].shape,
                                                    ref[name].shape)
        assert jnp.allclose(out[name], ref[name], atol=2e-5, rtol=1e-4), name

    # Case 2: multi-tile, lane-dense grid (3 tiles of 128 lanes), sigmoid path.
    K2, B2, P2 = 16, 384, 5
    score2 = jax.random.normal(k3, (K2, B2, 2), dtype=jnp.float32)
    valid2 = (jax.random.uniform(k4, (K2, B2)) > 0.5).astype(jnp.float32)

    out2 = jrc_loss_one(score2, valid2, P2, alpha=0.25, non_sigmoid=False,
                        b_tile=128)
    out2 = jax.tree_util.tree_map(jax.block_until_ready, out2)
    ref2 = _jrc_one_ref(score2, valid2, P2, alpha=0.25, non_sigmoid=False)
    for name in ref2:
        assert out2[name].shape == ref2[name].shape, name
        assert jnp.allclose(out2[name], ref2[name], atol=2e-5, rtol=1e-4), name

    print("KERNEL_OK")
</pallas_src>

<mosaic_0001>
module attributes {stable_mosaic.version = 11 : i64} {
  func.func @_jrc_one_kernel(%arg0: i32, %arg1: memref<16x12xf32, #tpu.memory_space<vmem>>, %arg2: memref<16x12xf32, #tpu.memory_space<vmem>>, %arg3: memref<16x12xf32, #tpu.memory_space<vmem>>, %arg4: memref<16x12xf32, #tpu.memory_space<vmem>>, %arg5: memref<16x12xf32, #tpu.memory_space<vmem>>, %arg6: memref<16x12xf32, #tpu.memory_space<vmem>>, %arg7: memref<1x12xf32, #tpu.memory_space<vmem>>, %arg8: memref<1x12xf32, #tpu.memory_space<vmem>>) attributes {dimension_semantics = [#tpu.dimension_semantics<parallel>], iteration_bounds = array<i64: 1>, scalar_prefetch = 0 : i64, scratch_operands = 0 : i64, tpu.core_type = #tpu.core_type<tc>, window_params = [{transform_indices = @transform_0, window_bounds = array<i64: 16, 12>}, {transform_indices = @transform_1, window_bounds = array<i64: 16, 12>}, {transform_indices = @transform_2, window_bounds = array<i64: 16, 12>}, {transform_indices = @transform_3, window_bounds = array<i64: 16, 12>}, {transform_indices = @transform_4, window_bounds = array<i64: 16, 12>}, {transform_indices = @transform_5, window_bounds = array<i64: 16, 12>}, {transform_indices = @transform_6, window_bounds = array<i64: 1, 12>}, {transform_indices = @transform_7, window_bounds = array<i64: 1, 12>}]} {
    %c0 = arith.constant 0 : index
    %c0_0 = arith.constant 0 : index
    %0 = vector.load %arg1[%c0, %c0_0] : memref<16x12xf32, #tpu.memory_space<vmem>>, vector<16x12xf32>
    %c0_1 = arith.constant 0 : index
    %c0_2 = arith.constant 0 : index
    %1 = vector.load %arg2[%c0_1, %c0_2] : memref<16x12xf32, #tpu.memory_space<vmem>>, vector<16x12xf32>
    %c0_3 = arith.constant 0 : index
    %c0_4 = arith.constant 0 : index
    %2 = vector.load %arg3[%c0_3, %c0_4] : memref<16x12xf32, #tpu.memory_space<vmem>>, vector<16x12xf32>
    %3 = tpu.iota {dimensions = array<i32: 0>} : vector<16x1xi32>
    %c4_i32 = arith.constant 4 : i32
    %4 = vector.broadcast %c4_i32 : i32 to vector<16x1xi32>
    %5 = arith.cmpi slt, %3, %4 : vector<16x1xi32>
    %6 = arith.extui %5 : vector<16x1xi1> to vector<16x1xi32>
    %7 = arith.sitofp %6 : vector<16x1xi32> to vector<16x1xf32>
    %8 = arith.subf %1, %0 : vector<16x12xf32>
    %9 = vector.broadcast %7 : vector<16x1xf32> to vector<16x12xf32>
    %10 = arith.mulf %9, %8 : vector<16x12xf32>
    %11 = arith.addf %0, %10 : vector<16x12xf32>
    %cst = arith.constant 2.000000e+00 : f32
    %12 = vector.broadcast %cst : f32 to vector<16x1xf32>
    %13 = arith.mulf %12, %7 : vector<16x1xf32>
    %cst_5 = arith.constant 1.000000e+00 : f32
    %14 = vector.broadcast %cst_5 : f32 to vector<16x1xf32>
    %15 = arith.subf %14, %13 : vector<16x1xf32>
    %16 = vector.broadcast %15 : vector<16x1xf32> to vector<16x12xf32>
    %17 = arith.mulf %8, %16 : vector<16x12xf32>
    %cst_6 = arith.constant 0.000000e+00 : f32
    %18 = vector.broadcast %cst_6 : f32 to vector<16x12xf32>
    %19 = arith.maximumf %17, %18 : vector<16x12xf32>
    %20 = math.absf %17 : vector<16x12xf32>
    %cst_7 = arith.constant 0.000000e+00 : f32
    %21 = vector.broadcast %cst_7 : f32 to vector<16x12xf32>
    %22 = arith.subf %21, %20 : vector<16x12xf32>
    %23 = math.exp %22 : vector<16x12xf32>
    %24 = math.log1p %23 : vector<16x12xf32>
    %25 = arith.addf %19, %24 : vector<16x12xf32>
    %cst_8 = arith.constant dense<0xFF800000> : vector<12xf32>
    %26 = vector.multi_reduction <maximumf>, %0, %cst_8 [0] : vector<16x12xf32> to vector<12xf32>
    %27 = vector.shape_cast %26 : vector<12xf32> to vector<1x12xf32>
    %cst_9 = arith.constant dense<0xFF800000> : vector<12xf32>
    %28 = vector.multi_reduction <maximumf>, %1, %cst_9 [0] : vector<16x12xf32> to vector<12xf32>
    %29 = vector.shape_cast %28 : vector<12xf32> to vector<1x12xf32>
    %30 = vector.broadcast %27 : vector<1x12xf32> to vector<16x12xf32>
    %31 = arith.subf %0, %30 : vector<16x12xf32>
    %32 = math.exp %31 : vector<16x12xf32>
    %cst_10 = arith.constant dense<0.000000e+00> : vector<12xf32>
    %33 = vector.multi_reduction <add>, %32, %cst_10 [0] : vector<16x12xf32> to vector<12xf32>
    %34 = vector.shape_cast %33 : vector<12xf32> to vector<1x12xf32>
    %35 = math.log %34 : vector<1x12xf32>
    %36 = arith.addf %27, %35 : vector<1x12xf32>
    %37 = vector.broadcast %29 : vector<1x12xf32> to vector<16x12xf32>
    %38 = arith.subf %1, %37 : vector<16x12xf32>
    %39 = math.exp %38 : vector<16x12xf32>
    %cst_11 = arith.constant dense<0.000000e+00> : vector<12xf32>
    %40 = vector.multi_reduction <add>, %39, %cst_11 [0] : vector<16x12xf32> to vector<12xf32>
    %41 = vector.shape_cast %40 : vector<12xf32> to vector<1x12xf32>
    %42 = math.log %41 : vector<1x12xf32>
    %43 = arith.addf %29, %42 : vector<1x12xf32>
    %44 = arith.subf %43, %36 : vector<1x12xf32>
    %45 = vector.broadcast %7 : vector<16x1xf32> to vector<16x12xf32>
    %46 = vector.broadcast %44 : vector<1x12xf32> to vector<16x12xf32>
    %47 = arith.mulf %45, %46 : vector<16x12xf32>
    %48 = vector.broadcast %36 : vector<1x12xf32> to vector<16x12xf32>
    %49 = arith.addf %48, %47 : vector<16x12xf32>
    %50 = arith.subf %49, %11 : vector<16x12xf32>
    %cst_12 = arith.constant 5.000000e-01 : f32
    %51 = vector.broadcast %cst_12 : f32 to vector<16x12xf32>
    %52 = arith.mulf %51, %25 : vector<16x12xf32>
    %cst_13 = arith.constant 5.000000e-01 : f32
    %53 = vector.broadcast %cst_13 : f32 to vector<16x12xf32>
    %54 = arith.mulf %53, %50 : vector<16x12xf32>
    %55 = arith.addf %52, %54 : vector<16x12xf32>
    %56 = arith.mulf %2, %55 : vector<16x12xf32>
    %c0_14 = arith.constant 0 : index
    %c0_15 = arith.constant 0 : index
    %57 = vector.load %arg4[%c0_14, %c0_15] : memref<16x12xf32, #tpu.memory_space<vmem>>, vector<16x12xf32>
    tpu.vector_store %arg4[%c0_14, %c0_15], %56 {strides = array<i32>} : memref<16x12xf32, #tpu.memory_space<vmem>>, vector<16x12xf32>,
    %c0_16 = arith.constant 0 : index
    %c0_17 = arith.constant 0 : index
    %58 = vector.load %arg5[%c0_16, %c0_17] : memref<16x12xf32, #tpu.memory_space<vmem>>, vector<16x12xf32>
    tpu.vector_store %arg5[%c0_16, %c0_17], %25 {strides = array<i32>} : memref<16x12xf32, #tpu.memory_space<vmem>>, vector<16x12xf32>,
    %c0_18 = arith.constant 0 : index
    %c0_19 = arith.constant 0 : index
    %59 = vector.load %arg6[%c0_18, %c0_19] : memref<16x12xf32, #tpu.memory_space<vmem>>, vector<16x12xf32>
    tpu.vector_store %arg6[%c0_18, %c0_19], %50 {strides = array<i32>} : memref<16x12xf32, #tpu.memory_space<vmem>>, vector<16x12xf32>,
    %cst_20 = arith.constant dense<0xFF800000> : vector<12xf32>
    %60 = vector.multi_reduction <maximumf>, %8, %cst_20 [0] : vector<16x12xf32> to vector<12xf32>
    %61 = vector.shape_cast %60 : vector<12xf32> to vector<1x12xf32>
    %62 = arith.negf %61 : vector<1x12xf32>
    %63 = math.exp %62 : vector<1x12xf32>
    %cst_21 = arith.constant 1.000000e+00 : f32
    %64 = vector.broadcast %cst_21 : f32 to vector<1x12xf32>
    %65 = arith.addf %64, %63 : vector<1x12xf32>
    %66 = arith.divf %64, %65 : vector<1x12xf32>
    %c0_22 = arith.constant 0 : index
    %c0_23 = arith.constant 0 : index
    %67 = vector.load %arg7[%c0_22, %c0_23] : memref<1x12xf32, #tpu.memory_space<vmem>>, vector<1x12xf32>
    tpu.vector_store %arg7[%c0_22, %c0_23], %66 {strides = array<i32>} : memref<1x12xf32, #tpu.memory_space<vmem>>, vector<1x12xf32>,
    %cst_24 = arith.constant dense<0x7F800000> : vector<12xf32>
    %68 = vector.multi_reduction <minimumf>, %8, %cst_24 [0] : vector<16x12xf32> to vector<12xf32>
    %69 = vector.shape_cast %68 : vector<12xf32> to vector<1x12xf32>
    %70 = arith.negf %69 : vector<1x12xf32>
    %71 = math.exp %70 : vector<1x12xf32>
    %cst_25 = arith.constant 1.000000e+00 : f32
    %72 = vector.broadcast %cst_25 : f32 to vector<1x12xf32>
    %73 = arith.addf %72, %71 : vector<1x12xf32>
    %74 = arith.divf %72, %73 : vector<1x12xf32>
    %c0_26 = arith.constant 0 : index
    %c0_27 = arith.constant 0 : index
    %75 = vector.load %arg8[%c0_26, %c0_27] : memref<1x12xf32, #tpu.memory_space<vmem>>, vector<1x12xf32>
    tpu.vector_store %arg8[%c0_26, %c0_27], %74 {strides = array<i32>} : memref<1x12xf32, #tpu.memory_space<vmem>>, vector<1x12xf32>,
    return
  }
  func.func @transform_0(%arg0: i32) -> (i32, i32) {
    %c0_i32 = arith.constant 0 : i32
    %c0_i32_0 = arith.constant 0 : i32
    return %c0_i32, %arg0 : i32, i32
  }
  func.func @transform_1(%arg0: i32) -> (i32, i32) {
    %c0_i32 = arith.constant 0 : i32
    %c0_i32_0 = arith.constant 0 : i32
    return %c0_i32, %arg0 : i32, i32
  }
  func.func @transform_2(%arg0: i32) -> (i32, i32) {
    %c0_i32 = arith.constant 0 : i32
    %c0_i32_0 = arith.constant 0 : i32
    return %c0_i32, %arg0 : i32, i32
  }
  func.func @transform_3(%arg0: i32) -> (i32, i32) {
    %c0_i32 = arith.constant 0 : i32
    %c0_i32_0 = arith.constant 0 : i32
    return %c0_i32, %arg0 : i32, i32
  }
  func.func @transform_4(%arg0: i32) -> (i32, i32) {
    %c0_i32 = arith.constant 0 : i32
    %c0_i32_0 = arith.constant 0 : i32
    return %c0_i32, %arg0 : i32, i32
  }
  func.func @transform_5(%arg0: i32) -> (i32, i32) {
    %c0_i32 = arith.constant 0 : i32
    %c0_i32_0 = arith.constant 0 : i32
    return %c0_i32, %arg0 : i32, i32
  }
  func.func @transform_6(%arg0: i32) -> (i32, i32) {
    %c0_i32 = arith.constant 0 : i32
    %c0_i32_0 = arith.constant 0 : i32
    return %c0_i32, %arg0 : i32, i32
  }
  func.func @transform_7(%arg0: i32) -> (i32, i32) {
    %c0_i32 = arith.constant 0 : i32
    %c0_i32_0 = arith.constant 0 : i32
    return %c0_i32, %arg0 : i32, i32
  }
}

</mosaic_0001>

<llo_original>
// kernel: tpu_custom_call.1
$region0: #{tpu_custom_call.1}
  #allocation0 [shape = 'u32[]', space=smem, size = 0x4, offset = 0x4, fixed_abs, tag = 'smem constant byte address 0x4 - core index']
  #allocation1 [shape = 'u32[72,128]{1,0:T(1,128)}', space=vmem, size = 0x9000, scoped, tag = 'internal scratch']
  %s0 = inlined_call_operand.hbm [shape: f32[16,12], index: 0, kind: input, shape index: {}]
  %s1 = inlined_call_operand.hbm [shape: f32[16,12], index: 1, kind: input, shape index: {}]
  %s2 = inlined_call_operand.hbm [shape: f32[16,12], index: 2, kind: input, shape index: {}]
  %s3 = inlined_call_operand.hbm [shape: f32[16,12], index: 3, kind: output, shape index: {0}]
  %s4 = inlined_call_operand.hbm [shape: f32[16,12], index: 4, kind: output, shape index: {1}]
  %s5 = inlined_call_operand.hbm [shape: f32[16,12], index: 5, kind: output, shape index: {2}]
  %s6 = inlined_call_operand.hbm [shape: f32[1,12], index: 6, kind: output, shape index: {3}]
  %s7 = inlined_call_operand.hbm [shape: f32[1,12], index: 7, kind: output, shape index: {4}]
  %8 = xla_tuple %s3, %s4, %s5, %s6, %s7
  %s9 = sld [smem:[#allocation0]]
  $region66: #{tpu_custom_call.1} parent=0
    _
  %s11 = ssub.s32 1, %s9
  %s12 = scalar_select 0, %s11, %s9
  $region1: #{tpu_custom_call.1} parent=0
    #allocation2 [shape = 'u8[8192]{0}', space=vmem, size = 0x2000, scoped, tag = 'input window, operand 0, single buffered']
    #allocation3 [shape = 's32[1]{0}', space=sflag, size = 0x4, scoped, tag = 'scoped memory for tpu_custom_call.1']
    #allocation4 [shape = 's32[1]{0}', space=sflag, size = 0x4, scoped, tag = 'scoped memory for tpu_custom_call.1']
    #allocation5 [shape = 'u8[8192]{0}', space=vmem, size = 0x2000, scoped, tag = 'input window, operand 1, single buffered']
    #allocation6 [shape = 's32[1]{0}', space=sflag, size = 0x4, scoped, tag = 'scoped memory for tpu_custom_call.1']
    #allocation7 [shape = 'u8[8192]{0}', space=vmem, size = 0x2000, scoped, tag = 'input window, operand 2, single buffered']
    #allocation8 [shape = 'u8[8192]{0}', space=vmem, size = 0x2000, scoped, tag = 'output window, operand 0, single buffered']
    #allocation9 [shape = 'u8[8192]{0}', space=vmem, size = 0x2000, scoped, tag = 'output window, operand 1, single buffered']
    #allocation10 [shape = 's32[1]{0}', space=sflag, size = 0x4, scoped, tag = 'scoped memory for tpu_custom_call.1']
    #allocation11 [shape = 'u8[8192]{0}', space=vmem, size = 0x2000, scoped, tag = 'output window, operand 2, single buffered']
    #allocation12 [shape = 'u8[512]{0}', space=vmem, size = 0x400, scoped, tag = 'output window, operand 3, single buffered']
    #allocation13 [shape = 's32[1]{0}', space=sflag, size = 0x4, scoped, tag = 'scoped memory for tpu_custom_call.1']
    #allocation14 [shape = 'u8[512]{0}', space=vmem, size = 0x400, scoped, tag = 'output window, operand 4, single buffered']
    %13 = vsyncpa [#allocation3], 0
    %14 = vsyncpa [#allocation6], 0
    %15 = vsyncpa [#allocation4], 0
    %16 = vsyncpa [#allocation10], 0
    %17 = vsyncpa [#allocation13], 0
    // Predicated region
    $region2: #{tpu_custom_call.1} parent=1 // pred_check
      _
    $region3: #{tpu_custom_call.1} parent=1 // pred_check_branch
      %19 = sbr.rel (0) target = $region5
    $region4: #{tpu_custom_call.1} parent=1 // pred_region
      %21 = vsyncadd [#allocation3], 0
      %s22 = sshll.u32 %s0, 4
      %s23 = int_to_ptr.hbm [resolvable:$true] %s22
      %s24 = sshll.u32 [#allocation2], 4
      %s25 = int_to_ptr.vmem [resolvable:$true] %s24
      %30 = dma.hbm_to_vmem [thread:$0]  %s23, 256, %s25, [#allocation3], 128, 128, 8
    $region5: #{tpu_custom_call.1} parent=1 // pred_fallthru
      _
    // Predicated region
    $region6: #{tpu_custom_call.1} parent=1 // pred_check
      _
    $region7: #{tpu_custom_call.1} parent=1 // pred_check_branch
      %32 = sbr.rel (0) target = $region9
    $region8: #{tpu_custom_call.1} parent=1 // pred_region
      %34 = vsyncadd [#allocation6], 0
      %s35 = sshll.u32 %s1, 4
      %s36 = int_to_ptr.hbm [resolvable:$true] %s35
      %s37 = sshll.u32 [#allocation5], 4
      %s38 = int_to_ptr.vmem [resolvable:$true] %s37
      %43 = dma.hbm_to_vmem [thread:$0]  %s36, 256, %s38, [#allocation6], 128, 128, 8
    $region9: #{tpu_custom_call.1} parent=1 // pred_fallthru
      _
    // Predicated region
    $region10: #{tpu_custom_call.1} parent=1 // pred_check
      _
    $region11: #{tpu_custom_call.1} parent=1 // pred_check_branch
      %45 = sbr.rel (0) target = $region13
    $region12: #{tpu_custom_call.1} parent=1 // pred_region
      %47 = vsyncadd [#allocation6], 0
      %s48 = sshll.u32 %s2, 4
      %s49 = int_to_ptr.hbm [resolvable:$true] %s48
      %s50 = sshll.u32 [#allocation7], 4
      %s51 = int_to_ptr.vmem [resolvable:$true] %s50
      %56 = dma.hbm_to_vmem [thread:$0]  %s49, 256, %s51, [#allocation6], 128, 128, 8
    $region13: #{tpu_custom_call.1} parent=1 // pred_fallthru
      _
    // Predicated region
    $region14: #{tpu_custom_call.1} parent=1 // pred_check
      _
    $region15: #{tpu_custom_call.1} parent=1 // pred_check_branch
      %58 = sbr.rel (0) target = $region17
    $region16: #{tpu_custom_call.1} parent=1 // pred_region
      %60 = dma.done [#allocation3], 256
    $region17: #{tpu_custom_call.1} parent=1 // pred_fallthru
      _
    // Predicated region
    $region18: #{tpu_custom_call.1} parent=1 // pred_check
      _
    $region19: #{tpu_custom_call.1} parent=1 // pred_check_branch
      %62 = sbr.rel (0) target = $region21
    $region20: #{tpu_custom_call.1} parent=1 // pred_region
      %64 = dma.done [#allocation6], 256
    $region21: #{tpu_custom_call.1} parent=1 // pred_fallthru
      _
    // Predicated region
    $region22: #{tpu_custom_call.1} parent=1 // pred_check
      _
    $region23: #{tpu_custom_call.1} parent=1 // pred_check_branch
      %66 = sbr.rel (0) target = $region25
    $region24: #{tpu_custom_call.1} parent=1 // pred_region
      %68 = dma.done [#allocation6], 256
    $region25: #{tpu_custom_call.1} parent=1 // pred_fallthru
      _
    %v69 = vld [vmem:[#allocation2] sm:$0xff]
    %v70 = vld [vmem:[#allocation2 + $0x8] sm:$0xff]
    %v71 = vld [vmem:[#allocation5] sm:$0xff]
    %v72 = vld [vmem:[#allocation5 + $0x8] sm:$0xff]
    %v73 = vld [vmem:[#allocation7] sm:$0xff]
    %v74 = vld [vmem:[#allocation7 + $0x8] sm:$0xff]
    %v75 = vlaneseq
    %v76 = vshrl.u32 %v75, 7
    %v77 = vadd.s32 %v76, 8
    %vm78 = vcmp.lt.s32.totalorder %v76, 4
    %vm79 = vcmp.lt.s32.totalorder %v77, 4
    %v80 = vsel %vm78, 1, 0
    %v81 = vsel %vm79, 1, 0
    %v82 = vcvt.s32.f32 %v80
    %v83 = vcvt.s32.f32 %v81
    %v84 = vsub.f32 %v71, %v69
    %v85 = vsub.f32 %v72, %v70
    %v86 = vmul.f32 %v82, %v84
    %v87 = vmul.f32 %v83, %v85
    %v88 = vadd.f32 %v69, %v86
    %v89 = vadd.f32 %v70, %v87
    %v90 = vmul.f32 %v82, 2.0
    %v91 = vmul.f32 %v83, 2.0
    %v92 = vsub.f32 1.0, %v90
    %v93 = vsub.f32 1.0, %v91
    %v94 = vmul.f32 %v84, %v92
    %v95 = vmul.f32 %v85, %v93
    %v96 = vmax.f32 %v94, 0.0
    %v97 = vmax.f32 %v95, 0.0
    %v98 = vand.u32 2147483647, %v94
    %v99 = vand.u32 2147483647, %v95
    %v100 = vsub.f32 0.0, %v98
    %v101 = vsub.f32 0.0, %v99
    %v102 = vmul.f32 %v100, 1.442695
    %v103 = vpow.pop %v102
    %v104 = vmul.f32 %v101, 1.442695
    %v105 = vpow.pop %v104
    %v106 = vadd.f32 %v103, 1.0
    %v107 = vlog2.pop %v106
    %v108 = vmul.f32 %v107, 0.6931472
    %v109 = vmul.f32 -0.5, %v103
    %v110 = vadd.f32 %v109, 1.0
    %v111 = vmul.f32 %v110, %v103
    %v112 = vand.u32 2147483647, %v103
    %vm113 = vcmp.lt.f32.partialorder %v112, 0.0004427343
    %v114 = vsel %vm113, %v111, %v108
    %v115 = vadd.f32 %v105, 1.0
    %v116 = vlog2.pop %v115
    %v117 = vmul.f32 %v116, 0.6931472
    %v118 = vmul.f32 -0.5, %v105
    %v119 = vadd.f32 %v118, 1.0
    %v120 = vmul.f32 %v119, %v105
    %v121 = vand.u32 2147483647, %v105
    %vm122 = vcmp.lt.f32.partialorder %v121, 0.0004427343
    %v123 = vsel %vm122, %v120, %v117
    %v124 = vadd.f32 %v96, %v114
    %v125 = vadd.f32 %v97, %v123
    %vm126 = vcmask 97280
    %v127 = vsel %vm126, %v69, -inf
    %v128 = vsel %vm126, %v70, -inf
    %v129 = vmax.f32 %v127, %v128
    %v130 = vrot.slane %v129, 4
    %v131 = vmax.f32 %v129, %v130
    %v132 = vrot.slane %v131, 2
    %v133 = vmax.f32 %v131, %v132
    %v134 = vrot.slane %v133, 1
    %v135 = vmax.f32 %v133, %v134
    %v136 = vsel %vm126, %v71, -inf
    %v137 = vsel %vm126, %v72, -inf
    %v138 = vmax.f32 %v136, %v137
    %v139 = vrot.slane %v138, 4
    %v140 = vmax.f32 %v138, %v139
    %v141 = vrot.slane %v140, 2
    %v142 = vmax.f32 %v140, %v141
    %v143 = vrot.slane %v142, 1
    %v144 = vmax.f32 %v142, %v143
    %v145 = vsub.f32 %v69, %v135
    %v146 = vsub.f32 %v70, %v135
    %v147 = vmul.f32 %v145, 1.442695
    %v148 = vpow.pop %v147
    %v149 = vmul.f32 %v146, 1.442695
    %v150 = vpow.pop %v149
    %v151 = vsel %vm126, %v148, 0.0
    %v152 = vsel %vm126, %v150, 0.0
    %v153 = vadd.f32 %v151, %v152
    %v154 = vrot.slane %v153, 4
    %v155 = vadd.f32 %v153, %v154
    %v156 = vrot.slane %v155, 2
    %v157 = vadd.f32 %v155, %v156
    %v158 = vrot.slane %v157, 1
    %v159 = vadd.f32 %v157, %v158
    %v160 = vlog2.pop %v159
    %v161 = vmul.f32 %v160, 0.6931472
    %v162 = vadd.f32 %v135, %v161
    %v163 = vsub.f32 %v71, %v144
    %v164 = vsub.f32 %v72, %v144
    %v165 = vmul.f32 %v163, 1.442695
    %v166 = vpow.pop %v165
    %v167 = vmul.f32 %v164, 1.442695
    %v168 = vpow.pop %v167
    %v169 = vsel %vm126, %v166, 0.0
    %v170 = vsel %vm126, %v168, 0.0
    %v171 = vadd.f32 %v169, %v170
    %v172 = vrot.slane %v171, 4
    %v173 = vadd.f32 %v171, %v172
    %v174 = vrot.slane %v173, 2
    %v175 = vadd.f32 %v173, %v174
    %v176 = vrot.slane %v175, 1
    %v177 = vadd.f32 %v175, %v176
    %v178 = vlog2.pop %v177
    %v179 = vmul.f32 %v178, 0.6931472
    %v180 = vadd.f32 %v144, %v179
    %v181 = vsub.f32 %v180, %v162
    %v182 = vmul.f32 %v82, %v181
    %v183 = vmul.f32 %v83, %v181
    %v184 = vadd.f32 %v162, %v182
    %v185 = vadd.f32 %v162, %v183
    %v186 = vsub.f32 %v184, %v88
    %v187 = vsub.f32 %v185, %v89
    %v188 = vmul.f32 %v124, 0.5
    %v189 = vmul.f32 %v125, 0.5
    %v190 = vmul.f32 %v186, 0.5
    %v191 = vmul.f32 %v187, 0.5
    %v192 = vadd.f32 %v188, %v190
    %v193 = vadd.f32 %v189, %v191
    %v194 = vmul.f32 %v73, %v192
    %v195 = vmul.f32 %v74, %v193
    %196 = vst.msk [vmem:[#allocation8] sm:$0xff] %vm126, %v194
    %197 = vst.msk [vmem:[#allocation8 + $0x8] sm:$0xff] %vm126, %v195
    %198 = vst.msk [vmem:[#allocation9] sm:$0xff] %vm126, %v124
    %199 = vst.msk [vmem:[#allocation9 + $0x8] sm:$0xff] %vm126, %v125
    %200 = vst.msk [vmem:[#allocation11] sm:$0xff] %vm126, %v186
    %201 = vst.msk [vmem:[#allocation11 + $0x8] sm:$0xff] %vm126, %v187
    %v202 = vsel %vm126, %v84, -inf
    %v203 = vsel %vm126, %v85, -inf
    %v204 = vmax.f32 %v202, %v203
    %v205 = vrot.slane %v204, 4
    %v206 = vmax.f32 %v204, %v205
    %v207 = vrot.slane %v206, 2
    %v208 = vmax.f32 %v206, %v207
    %v209 = vrot.slane %v208, 1
    %v210 = vmax.f32 %v208, %v209
    %v211 = vxor.u32 %v210, 2147483648
    %v212 = vmul.f32 %v211, 1.442695
    %v213 = vpow.pop %v212
    %v214 = vadd.f32 %v213, 1.0
    %v215 = vrcp.pop %v214
    %v216 = vmul.f32 %v214, %v215
    %v217 = vsub.f32 1.0, %v216
    %v218 = vmul.f32 %v215, %v217
    %v219 = vadd.f32 %v215, %v218
    %vm220 = vweird.f32 %v214
    %vm221 = vweird.f32 %v215
    %vm222 = vmor %vm220, %vm221
    %v223 = vsel %vm222, %v215, %v219
    %v224 = vand.u32 2147483647, %v214
    %vm225 = vcmp.eq.f32.partialorder %v224, 8.507059e+37
    %v226 = vand.u32 %v214, 2147483648
    %v227 = vor.u32 1.1754944e-38, %v226
    %v228 = vsel %vm225, %v227, %v223
    %v229 = vmul.f32 1.0, %v228
    %vm230 = vcmask 90112
    %231 = vst.msk [vmem:[#allocation12] sm:$0x1] %vm230, %v229
    %v232 = vsel %vm126, %v84, inf
    %v233 = vsel %vm126, %v85, inf
    %v234 = vmin.f32 %v232, %v233
    %v235 = vrot.slane %v234, 4
    %v236 = vmin.f32 %v234, %v235
    %v237 = vrot.slane %v236, 2
    %v238 = vmin.f32 %v236, %v237
    %v239 = vrot.slane %v238, 1
    %v240 = vmin.f32 %v238, %v239
    %v241 = vxor.u32 %v240, 2147483648
    %v242 = vmul.f32 %v241, 1.442695
    %v243 = vpow.pop %v242
    %v244 = vadd.f32 %v243, 1.0
    %v245 = vrcp.pop %v244
    %v246 = vmul.f32 %v244, %v245
    %v247 = vsub.f32 1.0, %v246
    %v248 = vmul.f32 %v245, %v247
    %v249 = vadd.f32 %v245, %v248
    %vm250 = vweird.f32 %v244
    %vm251 = vweird.f32 %v245
    %vm252 = vmor %vm250, %vm251
    %v253 = vsel %vm252, %v245, %v249
    %v254 = vand.u32 2147483647, %v244
    %vm255 = vcmp.eq.f32.partialorder %v254, 8.507059e+37
    %v256 = vand.u32 %v244, 2147483648
    %v257 = vor.u32 1.1754944e-38, %v256
    %v258 = vsel %vm255, %v257, %v253
    %v259 = vmul.f32 1.0, %v258
    %260 = vst.msk [vmem:[#allocation14] sm:$0x1] %vm230, %v259
    // Predicated region
    $region26: #{tpu_custom_call.1} parent=1 // pred_check
      _
    $region27: #{tpu_custom_call.1} parent=1 // pred_check_branch
      %262 = sbr.rel (0) target = $region29
    $region28: #{tpu_custom_call.1} parent=1 // pred_region
      %264 = vsyncadd [#allocation4], 0
      %s265 = sshll.u32 [#allocation8], 4
      %s266 = int_to_ptr.vmem [resolvable:$true] %s265
      %s267 = sshll.u32 %s3, 4
      %s268 = int_to_ptr.hbm [resolvable:$true] %s267
      %273 = dma.vmem_to_hbm [thread:$0]  %s266, 256, %s268, [#allocation4], 128, 128, 8
    $region29: #{tpu_custom_call.1} parent=1 // pred_fallthru
      _
    // Predicated region
    $region30: #{tpu_custom_call.1} parent=1 // pred_check
      _
    $region31: #{tpu_custom_call.1} parent=1 // pred_check_branch
      %275 = sbr.rel (0) target = $region33
    $region32: #{tpu_custom_call.1} parent=1 // pred_region
      %277 = vsyncadd [#allocation10], 0
      %s278 = sshll.u32 [#allocation9], 4
      %s279 = int_to_ptr.vmem [resolvable:$true] %s278
      %s280 = sshll.u32 %s4, 4
      %s281 = int_to_ptr.hbm [resolvable:$true] %s280
      %286 = dma.vmem_to_hbm [thread:$0]  %s279, 256, %s281, [#allocation10], 128, 128, 8
    $region33: #{tpu_custom_call.1} parent=1 // pred_fallthru
      _
    // Predicated region
    $region34: #{tpu_custom_call.1} parent=1 // pred_check
      _
    $region35: #{tpu_custom_call.1} parent=1 // pred_check_branch
      %288 = sbr.rel (0) target = $region37
    $region36: #{tpu_custom_call.1} parent=1 // pred_region
      %290 = vsyncadd [#allocation10], 0
      %s291 = sshll.u32 [#allocation11], 4
      %s292 = int_to_ptr.vmem [resolvable:$true] %s291
      %s293 = sshll.u32 %s5, 4
      %s294 = int_to_ptr.hbm [resolvable:$true] %s293
      %299 = dma.vmem_to_hbm [thread:$0]  %s292, 256, %s294, [#allocation10], 128, 128, 8
    $region37: #{tpu_custom_call.1} parent=1 // pred_fallthru
      _
    // Predicated region
    $region38: #{tpu_custom_call.1} parent=1 // pred_check
      _
    $region39: #{tpu_custom_call.1} parent=1 // pred_check_branch
      %301 = sbr.rel (0) target = $region41
    $region40: #{tpu_custom_call.1} parent=1 // pred_region
      %303 = vsyncadd [#allocation13], 0
      %s305 = sshll.u32 [#allocation12], 4
      %s306 = int_to_ptr.vmem [resolvable:$true] %s305
      %s307 = sshll.u32 %s6, 4
      %s308 = int_to_ptr.hbm [resolvable:$true] %s307
      %310 = dma.vmem_to_hbm [thread:$0]  %s306, 16, %s308, [#allocation13]
    $region41: #{tpu_custom_call.1} parent=1 // pred_fallthru
      _
    // Predicated region
    $region42: #{tpu_custom_call.1} parent=1 // pred_check
      _
    $region43: #{tpu_custom_call.1} parent=1 // pred_check_branch
      %312 = sbr.rel (0) target = $region45
    $region44: #{tpu_custom_call.1} parent=1 // pred_region
      %314 = vsyncadd [#allocation13], 0
      %s316 = sshll.u32 [#allocation14], 4
      %s317 = int_to_ptr.vmem [resolvable:$true] %s316
      %s318 = sshll.u32 %s7, 4
      %s319 = int_to_ptr.hbm [resolvable:$true] %s318
      %321 = dma.vmem_to_hbm [thread:$0]  %s317, 16, %s319, [#allocation13]
    $region45: #{tpu_custom_call.1} parent=1 // pred_fallthru
      _
    // Predicated region
    $region46: #{tpu_custom_call.1} parent=1 // pred_check
      _
    $region47: #{tpu_custom_call.1} parent=1 // pred_check_branch
      %323 = sbr.rel (0) target = $region49
    $region48: #{tpu_custom_call.1} parent=1 // pred_region
      %325 = dma.done [#allocation4], 256
    $region49: #{tpu_custom_call.1} parent=1 // pred_fallthru
      _
    // Predicated region
    $region50: #{tpu_custom_call.1} parent=1 // pred_check
      _
    $region51: #{tpu_custom_call.1} parent=1 // pred_check_branch
      %327 = sbr.rel (0) target = $region53
    $region52: #{tpu_custom_call.1} parent=1 // pred_region
      %329 = dma.done [#allocation10], 256
    $region53: #{tpu_custom_call.1} parent=1 // pred_fallthru
      _
    // Predicated region
    $region54: #{tpu_custom_call.1} parent=1 // pred_check
      _
    $region55: #{tpu_custom_call.1} parent=1 // pred_check_branch
      %331 = sbr.rel (0) target = $region57
    $region56: #{tpu_custom_call.1} parent=1 // pred_region
      %333 = dma.done [#allocation10], 256
    $region57: #{tpu_custom_call.1} parent=1 // pred_fallthru
      _
    // Predicated region
    $region58: #{tpu_custom_call.1} parent=1 // pred_check
      _
    $region59: #{tpu_custom_call.1} parent=1 // pred_check_branch
      %335 = sbr.rel (0) target = $region61
    $region60: #{tpu_custom_call.1} parent=1 // pred_region
      %337 = dma.done [#allocation13], 16
    $region61: #{tpu_custom_call.1} parent=1 // pred_fallthru
      _
    // Predicated region
    $region62: #{tpu_custom_call.1} parent=1 // pred_check
      _
    $region63: #{tpu_custom_call.1} parent=1 // pred_check_branch
      %339 = sbr.rel (0) target = $region65
    $region64: #{tpu_custom_call.1} parent=1 // pred_region
      %341 = dma.done [#allocation13], 16
    $region65: #{tpu_custom_call.1} parent=1 // pred_fallthru
      _
    %342 = vsyncpa [#allocation3], 1
    %343 = vsyncpa [#allocation6], 1
    %344 = vsyncpa [#allocation4], 1
    %345 = vsyncpa [#allocation10], 1
    %346 = vsyncpa [#allocation13], 1

</llo_original>
